<compile_context>
chip_gen: v5e
topology: v5e:2x2
jax: 0.10.0
libtpu: 0.0.40
codegen_flags: <defaults>
</compile_context>

<pallas_src>
import jax
import jax.numpy as jnp
from jax import lax
from jax.experimental import pallas as pl
from jax.experimental.pallas import tpu as pltpu

EPS = 1e-5
ACT_DTYPE = jnp.bfloat16            # dtype of HBM intermediates (up, raw1, raw2)
VMEM_LIMIT = 48 * 1024 * 1024       # scoped-VMEM request for the conv kernels


# ---------------------------------------------------------------------------
# Tile-size helpers
# ---------------------------------------------------------------------------
def _divisors_desc(n):
    return [d for d in range(n, 0, -1) if n % d == 0]


def _pick_row_tile(n_rows, w, cap_rows=2048, max_unroll=64):
    """K1: pick TR (image rows of x1 per step) dividing n_rows with TR*w
    a multiple of 8 (or the full extent)."""
    for tr in _divisors_desc(n_rows):
        if tr > max_unroll:
            continue
        rows = tr * w
        if rows > cap_rows:
            continue
        if rows % 8 == 0 or tr == n_rows:
            return tr
    return 1


def _pick_h_tile(h, w, cin, cout, budget_bytes=20 << 20):
    """Largest TH dividing H whose per-step VMEM footprint (incl. the implicit
    f32 im2col temporary) fits the budget."""
    for th in _divisors_desc(h):
        patch = th * w * 9 * cin * 4                     # im2col temporary (f32)
        xpad = (th + 2) * (w + 2) * cin * 4              # halo scratch (f32)
        io = 2 * (th * w * cin * 4 + 2 * th * w * cout * 2)   # dbl-buffered tiles
        acc = 2 * th * w * cout * 4
        if patch + xpad + io + acc <= budget_bytes:
            return th
    return 1


def _pick_h_tile_lane(h, w, cap_elems=16384):
    """TH for the BN/ReLU/transpose-out kernel: keep TH*W a multiple of 128."""
    for th in _divisors_desc(h):
        if th * w > cap_elems:
            continue
        if (th * w) % 128 == 0:
            return th
    return h


# ---------------------------------------------------------------------------
# K1: transposed conv 2x2 stride 2.  One matmul per row-tile; the output is
# written as per-kh slabs of shape (rows, 2, W1, 2*Cout) whose row-major layout
# equals the interleaved NHWC tensor -> the interleave is a free reshape.
# ---------------------------------------------------------------------------
def _upconv_kernel(x_ref, w_ref, b_ref, o_ref):
    tr, _, w1, two_cu = o_ref.shape
    y = jnp.dot(x_ref[...], w_ref[...],
                preferred_element_type=jnp.float32) + b_ref[...]
    for t in range(tr):                       # static, small unroll
        rows = y[t * w1:(t + 1) * w1, :]      # (W1, 4*Cout), f32-aligned slice
        o_ref[t, 0, :, :] = rows[:, :two_cu].astype(o_ref.dtype)   # kh = 0
        o_ref[t, 1, :, :] = rows[:, two_cu:].astype(o_ref.dtype)   # kh = 1


def upconv2x2_stride2(x_nhwc, wt, bt):
    """x_nhwc: (N,H1,W1,Cin); wt: (Cin,Cout,2,2) [PyTorch ConvTranspose2d].
    Returns the interleaved (N, 2H1, 2W1, Cout) tensor in ACT_DTYPE."""
    n, h1, w1, cin = x_nhwc.shape
    cout = wt.shape[1]
    nh1 = n * h1
    # columns ordered (kh, kw, oc)
    w_mat = jnp.transpose(wt, (0, 2, 3, 1)).reshape(cin, 4 * cout)
    b_tile = jnp.tile(bt, 4).reshape(1, 4 * cout)
    x_flat = x_nhwc.reshape(nh1 * w1, cin)

    tr = _pick_row_tile(nh1, w1)
    y = pl.pallas_call(
        _upconv_kernel,
        grid=(nh1 // tr,),
        in_specs=[
            pl.BlockSpec((tr * w1, cin), lambda r: (r, 0)),
            pl.BlockSpec((cin, 4 * cout), lambda r: (0, 0)),
            pl.BlockSpec((1, 4 * cout), lambda r: (0, 0)),
        ],
        out_specs=pl.BlockSpec((tr, 2, w1, 2 * cout), lambda r: (r, 0, 0, 0)),
        out_shape=jax.ShapeDtypeStruct((nh1, 2, w1, 2 * cout), ACT_DTYPE),
        compiler_params=pltpu.CompilerParams(
            dimension_semantics=("parallel",)),
    )(x_flat, w_mat, b_tile)
    # (NH1, 2, W1, 2*Cout) row-major == (N, 2*H1, 2*W1, Cout): metadata reshape.
    return y.reshape(n, 2 * h1, 2 * w1, cout)


# ---------------------------------------------------------------------------
# Shared 3x3-conv core: im2col from the halo scratch + one fat-K matmul
# ---------------------------------------------------------------------------
def _conv3x3_from_xpad(xpad_ref, w_ref, b_ref, th, w):
    taps = [xpad_ref[dy:dy + th, dx:dx + w, :]
            for dy in range(3) for dx in range(3)]
    patch = jnp.concatenate(taps, axis=-1)              # (TH, W, 9*Cin)
    patch = patch.reshape(th * w, patch.shape[-1])      # (TH*W, 9*Cin)
    return (jnp.dot(patch, w_ref[...],
                    preferred_element_type=jnp.float32) + b_ref[...])


def _emit_partial_stats(acc, mean_ref, m2_ref):
    # Per-tile Welford pieces (mean, M2) in f32, computed on the f32 accumulator.
    cnt = acc.shape[0]
    mu = jnp.sum(acc, axis=0, keepdims=True) / cnt          # (1, Cout)
    cen = acc - mu
    mean_ref[...] = mu.reshape(1, 1, 1, -1)
    m2_ref[...] = jnp.sum(cen * cen, axis=0, keepdims=True).reshape(1, 1, 1, -1)


# ---------------------------------------------------------------------------
# K2a: conv1 = 3x3 conv over cat(X2, up); concat + zero-halo built in VMEM,
#      H-tiled with 1-row halos, per-(image, tile) partial BN stats.
# ---------------------------------------------------------------------------
def _conv1_kernel(x2_ref, x2t_ref, x2b_ref, up_ref, upt_ref, upb_ref,
                  w_ref, b_ref, raw_ref, mean_ref, m2_ref, xpad_ref):
    _, th, w, cout = raw_ref.shape
    c2 = x2_ref.shape[3]
    cin = xpad_ref.shape[2]
    h = pl.program_id(1)
    last = pl.num_programs(1) - 1

    # zero only the left/right halo column strips (everything else is written)
    zcol = jnp.zeros((th + 2, 1, cin), jnp.float32)
    xpad_ref[:, 0:1, :] = zcol
    xpad_ref[:, w + 1:w + 2, :] = zcol

    # interior: the "concat" = two channel-range stores (no temporary)
    xpad_ref[1:th + 1, 1:w + 1, 0:c2] = x2_ref[0].astype(jnp.float32)
    xpad_ref[1:th + 1, 1:w + 1, c2:cin] = up_ref[0].astype(jnp.float32)

    # 1-row halos; masked to zero at the image top/bottom (conv zero padding)
    top2 = jnp.where(h > 0, x2t_ref[0, 0].astype(jnp.float32), 0.0)
    topu = jnp.where(h > 0, upt_ref[0, 0].astype(jnp.float32), 0.0)
    bot2 = jnp.where(h < last, x2b_ref[0, 0].astype(jnp.float32), 0.0)
    botu = jnp.where(h < last, upb_ref[0, 0].astype(jnp.float32), 0.0)
    xpad_ref[0, 1:w + 1, 0:c2] = top2
    xpad_ref[0, 1:w + 1, c2:cin] = topu
    xpad_ref[th + 1, 1:w + 1, 0:c2] = bot2
    xpad_ref[th + 1, 1:w + 1, c2:cin] = botu

    acc = _conv3x3_from_xpad(xpad_ref, w_ref, b_ref, th, w)     # (TH*W, Cout) f32
    raw_ref[...] = acc.reshape(1, th, w, cout).astype(raw_ref.dtype)
    _emit_partial_stats(acc, mean_ref, m2_ref)


def conv1_concat_stats(x2, up, w_hwio, b, th):
    n, h, w, c2 = x2.shape
    cu = up.shape[-1]
    cin = c2 + cu
    cout = w_hwio.shape[-1]
    nh = h // th
    w_mat = w_hwio.reshape(9 * cin, cout)   # rows ordered (dy, dx, ci)

    main_map = lambda nn, hh: (nn, hh, 0, 0)
    top_map = lambda nn, hh: (nn, jnp.maximum(hh * th - 1, 0), 0, 0)
    bot_map = lambda nn, hh: (nn, jnp.minimum((hh + 1) * th, h - 1), 0, 0)
    stat_map = lambda nn, hh: (nn, hh, 0, 0)
    const_map = lambda nn, hh: (0, 0)

    raw, mean_p, m2_p = pl.pallas_call(
        _conv1_kernel,
        grid=(n, nh),
        in_specs=[
            pl.BlockSpec((1, th, w, c2), main_map),
            pl.BlockSpec((1, 1, w, c2), top_map),
            pl.BlockSpec((1, 1, w, c2), bot_map),
            pl.BlockSpec((1, th, w, cu), main_map),
            pl.BlockSpec((1, 1, w, cu), top_map),
            pl.BlockSpec((1, 1, w, cu), bot_map),
            pl.BlockSpec((9 * cin, cout), const_map),
            pl.BlockSpec((1, cout), const_map),
        ],
        out_specs=[
            pl.BlockSpec((1, th, w, cout), main_map),
            pl.BlockSpec((1, 1, 1, cout), stat_map),
            pl.BlockSpec((1, 1, 1, cout), stat_map),
        ],
        out_shape=[
            jax.ShapeDtypeStruct((n, h, w, cout), ACT_DTYPE),
            jax.ShapeDtypeStruct((n, nh, 1, cout), jnp.float32),
            jax.ShapeDtypeStruct((n, nh, 1, cout), jnp.float32),
        ],
        scratch_shapes=[pltpu.VMEM((th + 2, w + 2, cin), jnp.float32)],
        compiler_params=pltpu.CompilerParams(
            dimension_semantics=("parallel", "parallel"),
            vmem_limit_bytes=VMEM_LIMIT),
    )(x2, x2, x2, up, up, up, w_mat, b.reshape(1, cout))
    return raw, mean_p, m2_p


# ---------------------------------------------------------------------------
# K2b: conv2 = (BN1 + ReLU fused into the input load) -> 3x3 conv,
#      H-tiled with 1-row halos, per-(image, tile) partial BN stats.
# ---------------------------------------------------------------------------
def _conv2_kernel(x_ref, xt_ref, xb_ref, scale_ref, shift_ref,
                  w_ref, b_ref, raw_ref, mean_ref, m2_ref, xpad_ref):
    _, th, w, cout = raw_ref.shape
    cin = xpad_ref.shape[2]
    h = pl.program_id(1)
    last = pl.num_programs(1) - 1
    sc = scale_ref[0, :]
    sh = shift_ref[0, :]

    zcol = jnp.zeros((th + 2, 1, cin), jnp.float32)
    xpad_ref[:, 0:1, :] = zcol
    xpad_ref[:, w + 1:w + 2, :] = zcol

    # BN1 + ReLU fused into the load; halos masked AFTER BN+ReLU because the
    # conv's zero padding applies to the post-activation feature map.
    xin = jnp.maximum(x_ref[0].astype(jnp.float32) * sc + sh, 0.0)
    xpad_ref[1:th + 1, 1:w + 1, :] = xin
    top = jnp.maximum(xt_ref[0, 0].astype(jnp.float32) * sc + sh, 0.0)
    bot = jnp.maximum(xb_ref[0, 0].astype(jnp.float32) * sc + sh, 0.0)
    xpad_ref[0, 1:w + 1, :] = jnp.where(h > 0, top, 0.0)
    xpad_ref[th + 1, 1:w + 1, :] = jnp.where(h < last, bot, 0.0)

    acc = _conv3x3_from_xpad(xpad_ref, w_ref, b_ref, th, w)
    raw_ref[...] = acc.reshape(1, th, w, cout).astype(raw_ref.dtype)
    _emit_partial_stats(acc, mean_ref, m2_ref)


def conv2_bnrelu_in_stats(x, scale, shift, w_hwio, b, th):
    n, h, w, cin = x.shape
    cout = w_hwio.shape[-1]
    nh = h // th
    w_mat = w_hwio.reshape(9 * cin, cout)

    main_map = lambda nn, hh: (nn, hh, 0, 0)
    top_map = lambda nn, hh: (nn, jnp.maximum(hh * th - 1, 0), 0, 0)
    bot_map = lambda nn, hh: (nn, jnp.minimum((hh + 1) * th, h - 1), 0, 0)
    stat_map = lambda nn, hh: (nn, hh, 0, 0)
    const_map = lambda nn, hh: (0, 0)

    raw, mean_p, m2_p = pl.pallas_call(
        _conv2_kernel,
        grid=(n, nh),
        in_specs=[
            pl.BlockSpec((1, th, w, cin), main_map),
            pl.BlockSpec((1, 1, w, cin), top_map),
            pl.BlockSpec((1, 1, w, cin), bot_map),
            pl.BlockSpec((1, cin), const_map),
            pl.BlockSpec((1, cin), const_map),
            pl.BlockSpec((9 * cin, cout), const_map),
            pl.BlockSpec((1, cout), const_map),
        ],
        out_specs=[
            pl.BlockSpec((1, th, w, cout), main_map),
            pl.BlockSpec((1, 1, 1, cout), stat_map),
            pl.BlockSpec((1, 1, 1, cout), stat_map),
        ],
        out_shape=[
            jax.ShapeDtypeStruct((n, h, w, cout), ACT_DTYPE),
            jax.ShapeDtypeStruct((n, nh, 1, cout), jnp.float32),
            jax.ShapeDtypeStruct((n, nh, 1, cout), jnp.float32),
        ],
        scratch_shapes=[pltpu.VMEM((th + 2, w + 2, cin), jnp.float32)],
        compiler_params=pltpu.CompilerParams(
            dimension_semantics=("parallel", "parallel"),
            vmem_limit_bytes=VMEM_LIMIT),
    )(x, x, x, scale.reshape(1, cin), shift.reshape(1, cin),
      w_mat, b.reshape(1, cout))
    return raw, mean_p, m2_p


# ---------------------------------------------------------------------------
# K3: final BatchNorm + ReLU fused with the NHWC -> NCHW transpose-out.
#     H-tiled; output last dim is TH*W (lane-dense, multiple of 128).
# ---------------------------------------------------------------------------
def _bn_relu_to_nchw_kernel(x_ref, scale_ref, shift_ref, o_ref):
    _, th, w, c = x_ref.shape
    x = x_ref[0].astype(jnp.float32).reshape(th * w, c)
    y = jnp.maximum(x * scale_ref[0, :] + shift_ref[0, :], 0.0)
    o_ref[...] = y.T.reshape(1, c, th * w)


def bn_relu_to_nchw(x_nhwc, scale, shift, th):
    n, h, w, c = x_nhwc.shape
    nh = h // th
    out = pl.pallas_call(
        _bn_relu_to_nchw_kernel,
        grid=(n, nh),
        in_specs=[
            pl.BlockSpec((1, th, w, c), lambda nn, hh: (nn, hh, 0, 0)),
            pl.BlockSpec((1, c), lambda nn, hh: (0, 0)),
            pl.BlockSpec((1, c), lambda nn, hh: (0, 0)),
        ],
        out_specs=pl.BlockSpec((1, c, th * w), lambda nn, hh: (nn, 0, hh)),
        out_shape=jax.ShapeDtypeStruct((n, c, h * w), jnp.float32),
        compiler_params=pltpu.CompilerParams(
            dimension_semantics=("parallel", "parallel"),
            vmem_limit_bytes=VMEM_LIMIT),
    )(x_nhwc, scale.reshape(1, c), shift.reshape(1, c))
    return out.reshape(n, c, h, w)   # contiguous -> metadata-only reshape


# ---------------------------------------------------------------------------
# BN folding from per-tile Welford partials (tiny O(N*nH*C) glue)
# ---------------------------------------------------------------------------
def _fold_bn_from_partials(mean_p, m2_p, per_count, gamma, beta):
    c = mean_p.shape[-1]
    mp = mean_p.reshape(-1, c)                                   # (P, C)
    m2 = m2_p.reshape(-1, c)
    p = mp.shape[0]
    mean = jnp.mean(mp, axis=0)                                  # equal counts
    m2_tot = jnp.sum(m2, axis=0) + per_count * jnp.sum((mp - mean) ** 2, axis=0)
    var = m2_tot / (p * per_count)                               # biased (training BN)
    scale = gamma * lax.rsqrt(var + EPS)
    shift = beta - mean * scale
    return scale, shift


# ---------------------------------------------------------------------------
# Full module forward
# ---------------------------------------------------------------------------
def upconv_concat_forward(x1_nchw, x2_nchw, p):
    x1 = jnp.transpose(x1_nchw, (0, 2, 3, 1))  # -> NHWC
    x2 = jnp.transpose(x2_nchw, (0, 2, 3, 1))
    n, hf, wf, c2 = x2.shape

    # K1: upconv; output is already interleaved NHWC (bf16), no extra HBM pass.
    up = upconv2x2_stride2(x1, p["wt"], p["bt"])       # (N, Hf, Wf, Cu)
    cu = up.shape[-1]
    cout1 = p["w1"].shape[-1]
    cout2 = p["w2"].shape[-1]

    # conv1 over cat(X2, up) — concat done in VMEM inside the kernel
    th1 = _pick_h_tile(hf, wf, c2 + cu, cout1)
    raw1, m1, v1 = conv1_concat_stats(x2, up, p["w1"], p["b1"], th1)
    sc1, sh1 = _fold_bn_from_partials(m1, v1, th1 * wf, p["g1"], p["be1"])

    # conv2 with BN1+ReLU fused into its input load
    th2 = _pick_h_tile(hf, wf, cout1, cout2)
    raw2, m2_, v2 = conv2_bnrelu_in_stats(raw1, sc1, sh1, p["w2"], p["b2"], th2)
    sc2, sh2 = _fold_bn_from_partials(m2_, v2, th2 * wf, p["g2"], p["be2"])

    # final BN2 + ReLU fused with the NCHW transpose-out
    th3 = _pick_h_tile_lane(hf, wf)
    return bn_relu_to_nchw(raw2, sc2, sh2, th3)


# ---------------------------------------------------------------------------
# Pure-JAX reference (f32 throughout, HIGHEST precision)
# ---------------------------------------------------------------------------
def reference_forward(x1_nchw, x2_nchw, p):
    x1 = jnp.transpose(x1_nchw, (0, 2, 3, 1))
    x2 = jnp.transpose(x2_nchw, (0, 2, 3, 1))
    N, H, W, Cin = x1.shape
    Cout = p["wt"].shape[1]

    up = jnp.einsum("nhwi,iokl->nhkwlo", x1, p["wt"],
                    precision=lax.Precision.HIGHEST)
    up = up.reshape(N, 2 * H, 2 * W, Cout) + p["bt"]
    feat = jnp.concatenate([x2, up], axis=-1)

    def conv_bn_relu(x, w, b, g, be):
        y = lax.conv_general_dilated(
            x, w, window_strides=(1, 1), padding="SAME",
            dimension_numbers=("NHWC", "HWIO", "NHWC"),
            precision=lax.Precision.HIGHEST) + b
        mean = jnp.mean(y, axis=(0, 1, 2))
        var = jnp.var(y, axis=(0, 1, 2))
        return jnp.maximum(g * (y - mean) / jnp.sqrt(var + EPS) + be, 0.0)

    h1 = conv_bn_relu(feat, p["w1"], p["b1"], p["g1"], p["be1"])
    h2 = conv_bn_relu(h1, p["w2"], p["b2"], p["g2"], p["be2"])
    return jnp.transpose(h2, (0, 3, 1, 2))


# ---------------------------------------------------------------------------
if __name__ == "__main__":
    in_channels, out_channels = 8, 4
    N, H, W = 2, 8, 8  # X1 spatial; X2 / output spatial = 2H, 2W = 16

    key = jax.random.PRNGKey(0)
    ks = jax.random.split(key, 12)

    params = {
        # ConvTranspose2d(in, out, 2, 2): weight (Cin, Cout, 2, 2)
        "wt": 0.1 * jax.random.normal(ks[0], (in_channels, out_channels, 2, 2), jnp.float32),
        "bt": 0.05 * jax.random.normal(ks[1], (out_channels,), jnp.float32),
        # Conv2d(in, out, 3) as HWIO; input-channel order = [X2 channels, up channels]
        "w1": 0.1 * jax.random.normal(ks[2], (3, 3, in_channels, out_channels), jnp.float32),
        "b1": 0.05 * jax.random.normal(ks[3], (out_channels,), jnp.float32),
        "g1": 1.0 + 0.1 * jax.random.normal(ks[4], (out_channels,), jnp.float32),
        "be1": 0.05 * jax.random.normal(ks[5], (out_channels,), jnp.float32),
        # Conv2d(out, out, 3) as HWIO
        "w2": 0.1 * jax.random.normal(ks[6], (3, 3, out_channels, out_channels), jnp.float32),
        "b2": 0.05 * jax.random.normal(ks[7], (out_channels,), jnp.float32),
        "g2": 1.0 + 0.1 * jax.random.normal(ks[8], (out_channels,), jnp.float32),
        "be2": 0.05 * jax.random.normal(ks[9], (out_channels,), jnp.float32),
    }

    X1 = jax.random.normal(ks[10], (N, in_channels, H, W), jnp.float32)           # NCHW
    X2 = jax.random.normal(ks[11], (N, out_channels, 2 * H, 2 * W), jnp.float32)  # NCHW

    out = upconv_concat_forward(X1, X2, params)
    out = jax.block_until_ready(out)

    assert out.shape == (N, out_channels, 2 * H, 2 * W), out.shape

    ref = jax.block_until_ready(reference_forward(X1, X2, params))
    # bf16 HBM intermediates + default MXU precision (reference is f32/HIGHEST),
    # hence the documented tolerance.
    assert jnp.allclose(out, ref, atol=6e-2, rtol=6e-2), (
        float(jnp.max(jnp.abs(out - ref))))

    print("KERNEL_OK")
</pallas_src>

<mosaic_0001>
module attributes {stable_mosaic.version = 11 : i64} {
  func.func @_upconv_kernel(%arg0: i32, %arg1: memref<128x8xf32, #tpu.memory_space<vmem>>, %arg2: memref<8x16xf32, #tpu.memory_space<vmem>>, %arg3: memref<1x16xf32, #tpu.memory_space<vmem>>, %arg4: memref<16x2x8x8xbf16, #tpu.memory_space<vmem>>) attributes {dimension_semantics = [#tpu.dimension_semantics<parallel>], iteration_bounds = array<i64: 1>, scalar_prefetch = 0 : i64, scratch_operands = 0 : i64, tpu.core_type = #tpu.core_type<tc>, window_params = [{transform_indices = @transform_0, window_bounds = array<i64: 128, 8>}, {pipeline_mode = #tpu.pipeline_mode<synchronous>, transform_indices = @transform_1, window_bounds = array<i64: 8, 16>}, {pipeline_mode = #tpu.pipeline_mode<synchronous>, transform_indices = @transform_2, window_bounds = array<i64: 1, 16>}, {transform_indices = @transform_3, window_bounds = array<i64: 16, 2, 8, 8>}]} {
    %c0 = arith.constant 0 : index
    %c0_0 = arith.constant 0 : index
    %0 = vector.load %arg1[%c0, %c0_0] : memref<128x8xf32, #tpu.memory_space<vmem>>, vector<128x8xf32>
    %c0_1 = arith.constant 0 : index
    %c0_2 = arith.constant 0 : index
    %1 = vector.load %arg2[%c0_1, %c0_2] : memref<8x16xf32, #tpu.memory_space<vmem>>, vector<8x16xf32>
    %cst = arith.constant dense<0.000000e+00> : vector<128x16xf32>
    %2 = tpu.matmul %0, %1, %cst {dimension_numbers = #tpu.dot_dimension_numbers<[1], [0], [0], [1], [0, 0, 1, 1], [], []>} : vector<128x8xf32>, vector<8x16xf32>, vector<128x16xf32> -> vector<128x16xf32>
    %c0_3 = arith.constant 0 : index
    %c0_4 = arith.constant 0 : index
    %3 = vector.load %arg3[%c0_3, %c0_4] : memref<1x16xf32, #tpu.memory_space<vmem>>, vector<1x16xf32>
    %4 = vector.broadcast %3 : vector<1x16xf32> to vector<128x16xf32>
    %5 = arith.addf %2, %4 : vector<128x16xf32>
    %6 = vector.extract_strided_slice %5 {offsets = [0, 0], sizes = [8, 16], strides = [1, 1]} : vector<128x16xf32> to vector<8x16xf32>
    %7 = vector.extract_strided_slice %6 {offsets = [0, 0], sizes = [8, 8], strides = [1, 1]} : vector<8x16xf32> to vector<8x8xf32>
    %8 = arith.truncf %7 : vector<8x8xf32> to vector<8x8xbf16>
    %c0_5 = arith.constant 0 : index
    %c0_6 = arith.constant 0 : index
    %c0_7 = arith.constant 0 : index
    %c0_8 = arith.constant 0 : index
    %9 = vector.load %arg4[%c0_5, %c0_6, %c0_7, %c0_8] : memref<16x2x8x8xbf16, #tpu.memory_space<vmem>>, vector<1x1x8x8xbf16>
    %10 = vector.shape_cast %9 : vector<1x1x8x8xbf16> to vector<8x8xbf16>
    %11 = vector.shape_cast %8 : vector<8x8xbf16> to vector<1x1x8x8xbf16>
    tpu.vector_store %arg4[%c0_5, %c0_6, %c0_7, %c0_8], %11 {strides = array<i32>} : memref<16x2x8x8xbf16, #tpu.memory_space<vmem>>, vector<1x1x8x8xbf16>,
    %12 = vector.extract_strided_slice %6 {offsets = [0, 8], sizes = [8, 8], strides = [1, 1]} : vector<8x16xf32> to vector<8x8xf32>
    %13 = arith.truncf %12 : vector<8x8xf32> to vector<8x8xbf16>
    %c0_9 = arith.constant 0 : index
    %c1 = arith.constant 1 : index
    %c0_10 = arith.constant 0 : index
    %c0_11 = arith.constant 0 : index
    %14 = vector.load %arg4[%c0_9, %c1, %c0_10, %c0_11] : memref<16x2x8x8xbf16, #tpu.memory_space<vmem>>, vector<1x1x8x8xbf16>
    %15 = vector.shape_cast %14 : vector<1x1x8x8xbf16> to vector<8x8xbf16>
    %16 = vector.shape_cast %13 : vector<8x8xbf16> to vector<1x1x8x8xbf16>
    tpu.vector_store %arg4[%c0_9, %c1, %c0_10, %c0_11], %16 {strides = array<i32>} : memref<16x2x8x8xbf16, #tpu.memory_space<vmem>>, vector<1x1x8x8xbf16>,
    %17 = vector.extract_strided_slice %5 {offsets = [8, 0], sizes = [8, 16], strides = [1, 1]} : vector<128x16xf32> to vector<8x16xf32>
    %18 = vector.extract_strided_slice %17 {offsets = [0, 0], sizes = [8, 8], strides = [1, 1]} : vector<8x16xf32> to vector<8x8xf32>
    %19 = arith.truncf %18 : vector<8x8xf32> to vector<8x8xbf16>
    %c1_12 = arith.constant 1 : index
    %c0_13 = arith.constant 0 : index
    %c0_14 = arith.constant 0 : index
    %c0_15 = arith.constant 0 : index
    %20 = vector.load %arg4[%c1_12, %c0_13, %c0_14, %c0_15] : memref<16x2x8x8xbf16, #tpu.memory_space<vmem>>, vector<1x1x8x8xbf16>
    %21 = vector.shape_cast %20 : vector<1x1x8x8xbf16> to vector<8x8xbf16>
    %22 = vector.shape_cast %19 : vector<8x8xbf16> to vector<1x1x8x8xbf16>
    tpu.vector_store %arg4[%c1_12, %c0_13, %c0_14, %c0_15], %22 {strides = array<i32>} : memref<16x2x8x8xbf16, #tpu.memory_space<vmem>>, vector<1x1x8x8xbf16>,
    %23 = vector.extract_strided_slice %17 {offsets = [0, 8], sizes = [8, 8], strides = [1, 1]} : vector<8x16xf32> to vector<8x8xf32>
    %24 = arith.truncf %23 : vector<8x8xf32> to vector<8x8xbf16>
    %c1_16 = arith.constant 1 : index
    %c1_17 = arith.constant 1 : index
    %c0_18 = arith.constant 0 : index
    %c0_19 = arith.constant 0 : index
    %25 = vector.load %arg4[%c1_16, %c1_17, %c0_18, %c0_19] : memref<16x2x8x8xbf16, #tpu.memory_space<vmem>>, vector<1x1x8x8xbf16>
    %26 = vector.shape_cast %25 : vector<1x1x8x8xbf16> to vector<8x8xbf16>
    %27 = vector.shape_cast %24 : vector<8x8xbf16> to vector<1x1x8x8xbf16>
    tpu.vector_store %arg4[%c1_16, %c1_17, %c0_18, %c0_19], %27 {strides = array<i32>} : memref<16x2x8x8xbf16, #tpu.memory_space<vmem>>, vector<1x1x8x8xbf16>,
    %28 = vector.extract_strided_slice %5 {offsets = [16, 0], sizes = [8, 16], strides = [1, 1]} : vector<128x16xf32> to vector<8x16xf32>
    %29 = vector.extract_strided_slice %28 {offsets = [0, 0], sizes = [8, 8], strides = [1, 1]} : vector<8x16xf32> to vector<8x8xf32>
    %30 = arith.truncf %29 : vector<8x8xf32> to vector<8x8xbf16>
    %c2 = arith.constant 2 : index
    %c0_20 = arith.constant 0 : index
    %c0_21 = arith.constant 0 : index
    %c0_22 = arith.constant 0 : index
    %31 = vector.load %arg4[%c2, %c0_20, %c0_21, %c0_22] : memref<16x2x8x8xbf16, #tpu.memory_space<vmem>>, vector<1x1x8x8xbf16>
    %32 = vector.shape_cast %31 : vector<1x1x8x8xbf16> to vector<8x8xbf16>
    %33 = vector.shape_cast %30 : vector<8x8xbf16> to vector<1x1x8x8xbf16>
    tpu.vector_store %arg4[%c2, %c0_20, %c0_21, %c0_22], %33 {strides = array<i32>} : memref<16x2x8x8xbf16, #tpu.memory_space<vmem>>, vector<1x1x8x8xbf16>,
    %34 = vector.extract_strided_slice %28 {offsets = [0, 8], sizes = [8, 8], strides = [1, 1]} : vector<8x16xf32> to vector<8x8xf32>
    %35 = arith.truncf %34 : vector<8x8xf32> to vector<8x8xbf16>
    %c2_23 = arith.constant 2 : index
    %c1_24 = arith.constant 1 : index
    %c0_25 = arith.constant 0 : index
    %c0_26 = arith.constant 0 : index
    %36 = vector.load %arg4[%c2_23, %c1_24, %c0_25, %c0_26] : memref<16x2x8x8xbf16, #tpu.memory_space<vmem>>, vector<1x1x8x8xbf16>
    %37 = vector.shape_cast %36 : vector<1x1x8x8xbf16> to vector<8x8xbf16>
    %38 = vector.shape_cast %35 : vector<8x8xbf16> to vector<1x1x8x8xbf16>
    tpu.vector_store %arg4[%c2_23, %c1_24, %c0_25, %c0_26], %38 {strides = array<i32>} : memref<16x2x8x8xbf16, #tpu.memory_space<vmem>>, vector<1x1x8x8xbf16>,
    %39 = vector.extract_strided_slice %5 {offsets = [24, 0], sizes = [8, 16], strides = [1, 1]} : vector<128x16xf32> to vector<8x16xf32>
    %40 = vector.extract_strided_slice %39 {offsets = [0, 0], sizes = [8, 8], strides = [1, 1]} : vector<8x16xf32> to vector<8x8xf32>
    %41 = arith.truncf %40 : vector<8x8xf32> to vector<8x8xbf16>
    %c3 = arith.constant 3 : index
    %c0_27 = arith.constant 0 : index
    %c0_28 = arith.constant 0 : index
    %c0_29 = arith.constant 0 : index
    %42 = vector.load %arg4[%c3, %c0_27, %c0_28, %c0_29] : memref<16x2x8x8xbf16, #tpu.memory_space<vmem>>, vector<1x1x8x8xbf16>
    %43 = vector.shape_cast %42 : vector<1x1x8x8xbf16> to vector<8x8xbf16>
    %44 = vector.shape_cast %41 : vector<8x8xbf16> to vector<1x1x8x8xbf16>
    tpu.vector_store %arg4[%c3, %c0_27, %c0_28, %c0_29], %44 {strides = array<i32>} : memref<16x2x8x8xbf16, #tpu.memory_space<vmem>>, vector<1x1x8x8xbf16>,
    %45 = vector.extract_strided_slice %39 {offsets = [0, 8], sizes = [8, 8], strides = [1, 1]} : vector<8x16xf32> to vector<8x8xf32>
    %46 = arith.truncf %45 : vector<8x8xf32> to vector<8x8xbf16>
    %c3_30 = arith.constant 3 : index
    %c1_31 = arith.constant 1 : index
    %c0_32 = arith.constant 0 : index
    %c0_33 = arith.constant 0 : index
    %47 = vector.load %arg4[%c3_30, %c1_31, %c0_32, %c0_33] : memref<16x2x8x8xbf16, #tpu.memory_space<vmem>>, vector<1x1x8x8xbf16>
    %48 = vector.shape_cast %47 : vector<1x1x8x8xbf16> to vector<8x8xbf16>
    %49 = vector.shape_cast %46 : vector<8x8xbf16> to vector<1x1x8x8xbf16>
    tpu.vector_store %arg4[%c3_30, %c1_31, %c0_32, %c0_33], %49 {strides = array<i32>} : memref<16x2x8x8xbf16, #tpu.memory_space<vmem>>, vector<1x1x8x8xbf16>,
    %50 = vector.extract_strided_slice %5 {offsets = [32, 0], sizes = [8, 16], strides = [1, 1]} : vector<128x16xf32> to vector<8x16xf32>
    %51 = vector.extract_strided_slice %50 {offsets = [0, 0], sizes = [8, 8], strides = [1, 1]} : vector<8x16xf32> to vector<8x8xf32>
    %52 = arith.truncf %51 : vector<8x8xf32> to vector<8x8xbf16>
    %c4 = arith.constant 4 : index
    %c0_34 = arith.constant 0 : index
    %c0_35 = arith.constant 0 : index
    %c0_36 = arith.constant 0 : index
    %53 = vector.load %arg4[%c4, %c0_34, %c0_35, %c0_36] : memref<16x2x8x8xbf16, #tpu.memory_space<vmem>>, vector<1x1x8x8xbf16>
    %54 = vector.shape_cast %53 : vector<1x1x8x8xbf16> to vector<8x8xbf16>
    %55 = vector.shape_cast %52 : vector<8x8xbf16> to vector<1x1x8x8xbf16>
    tpu.vector_store %arg4[%c4, %c0_34, %c0_35, %c0_36], %55 {strides = array<i32>} : memref<16x2x8x8xbf16, #tpu.memory_space<vmem>>, vector<1x1x8x8xbf16>,
    %56 = vector.extract_strided_slice %50 {offsets = [0, 8], sizes = [8, 8], strides = [1, 1]} : vector<8x16xf32> to vector<8x8xf32>
    %57 = arith.truncf %56 : vector<8x8xf32> to vector<8x8xbf16>
    %c4_37 = arith.constant 4 : index
    %c1_38 = arith.constant 1 : index
    %c0_39 = arith.constant 0 : index
    %c0_40 = arith.constant 0 : index
    %58 = vector.load %arg4[%c4_37, %c1_38, %c0_39, %c0_40] : memref<16x2x8x8xbf16, #tpu.memory_space<vmem>>, vector<1x1x8x8xbf16>
    %59 = vector.shape_cast %58 : vector<1x1x8x8xbf16> to vector<8x8xbf16>
    %60 = vector.shape_cast %57 : vector<8x8xbf16> to vector<1x1x8x8xbf16>
    tpu.vector_store %arg4[%c4_37, %c1_38, %c0_39, %c0_40], %60 {strides = array<i32>} : memref<16x2x8x8xbf16, #tpu.memory_space<vmem>>, vector<1x1x8x8xbf16>,
    %61 = vector.extract_strided_slice %5 {offsets = [40, 0], sizes = [8, 16], strides = [1, 1]} : vector<128x16xf32> to vector<8x16xf32>
    %62 = vector.extract_strided_slice %61 {offsets = [0, 0], sizes = [8, 8], strides = [1, 1]} : vector<8x16xf32> to vector<8x8xf32>
    %63 = arith.truncf %62 : vector<8x8xf32> to vector<8x8xbf16>
    %c5 = arith.constant 5 : index
    %c0_41 = arith.constant 0 : index
    %c0_42 = arith.constant 0 : index
    %c0_43 = arith.constant 0 : index
    %64 = vector.load %arg4[%c5, %c0_41, %c0_42, %c0_43] : memref<16x2x8x8xbf16, #tpu.memory_space<vmem>>, vector<1x1x8x8xbf16>
    %65 = vector.shape_cast %64 : vector<1x1x8x8xbf16> to vector<8x8xbf16>
    %66 = vector.shape_cast %63 : vector<8x8xbf16> to vector<1x1x8x8xbf16>
    tpu.vector_store %arg4[%c5, %c0_41, %c0_42, %c0_43], %66 {strides = array<i32>} : memref<16x2x8x8xbf16, #tpu.memory_space<vmem>>, vector<1x1x8x8xbf16>,
    %67 = vector.extract_strided_slice %61 {offsets = [0, 8], sizes = [8, 8], strides = [1, 1]} : vector<8x16xf32> to vector<8x8xf32>
    %68 = arith.truncf %67 : vector<8x8xf32> to vector<8x8xbf16>
    %c5_44 = arith.constant 5 : index
    %c1_45 = arith.constant 1 : index
    %c0_46 = arith.constant 0 : index
    %c0_47 = arith.constant 0 : index
    %69 = vector.load %arg4[%c5_44, %c1_45, %c0_46, %c0_47] : memref<16x2x8x8xbf16, #tpu.memory_space<vmem>>, vector<1x1x8x8xbf16>
    %70 = vector.shape_cast %69 : vector<1x1x8x8xbf16> to vector<8x8xbf16>
    %71 = vector.shape_cast %68 : vector<8x8xbf16> to vector<1x1x8x8xbf16>
    tpu.vector_store %arg4[%c5_44, %c1_45, %c0_46, %c0_47], %71 {strides = array<i32>} : memref<16x2x8x8xbf16, #tpu.memory_space<vmem>>, vector<1x1x8x8xbf16>,
    %72 = vector.extract_strided_slice %5 {offsets = [48, 0], sizes = [8, 16], strides = [1, 1]} : vector<128x16xf32> to vector<8x16xf32>
    %73 = vector.extract_strided_slice %72 {offsets = [0, 0], sizes = [8, 8], strides = [1, 1]} : vector<8x16xf32> to vector<8x8xf32>
    %74 = arith.truncf %73 : vector<8x8xf32> to vector<8x8xbf16>
    %c6 = arith.constant 6 : index
    %c0_48 = arith.constant 0 : index
    %c0_49 = arith.constant 0 : index
    %c0_50 = arith.constant 0 : index
    %75 = vector.load %arg4[%c6, %c0_48, %c0_49, %c0_50] : memref<16x2x8x8xbf16, #tpu.memory_space<vmem>>, vector<1x1x8x8xbf16>
    %76 = vector.shape_cast %75 : vector<1x1x8x8xbf16> to vector<8x8xbf16>
    %77 = vector.shape_cast %74 : vector<8x8xbf16> to vector<1x1x8x8xbf16>
    tpu.vector_store %arg4[%c6, %c0_48, %c0_49, %c0_50], %77 {strides = array<i32>} : memref<16x2x8x8xbf16, #tpu.memory_space<vmem>>, vector<1x1x8x8xbf16>,
    %78 = vector.extract_strided_slice %72 {offsets = [0, 8], sizes = [8, 8], strides = [1, 1]} : vector<8x16xf32> to vector<8x8xf32>
    %79 = arith.truncf %78 : vector<8x8xf32> to vector<8x8xbf16>
    %c6_51 = arith.constant 6 : index
    %c1_52 = arith.constant 1 : index
    %c0_53 = arith.constant 0 : index
    %c0_54 = arith.constant 0 : index
    %80 = vector.load %arg4[%c6_51, %c1_52, %c0_53, %c0_54] : memref<16x2x8x8xbf16, #tpu.memory_space<vmem>>, vector<1x1x8x8xbf16>
    %81 = vector.shape_cast %80 : vector<1x1x8x8xbf16> to vector<8x8xbf16>
    %82 = vector.shape_cast %79 : vector<8x8xbf16> to vector<1x1x8x8xbf16>
    tpu.vector_store %arg4[%c6_51, %c1_52, %c0_53, %c0_54], %82 {strides = array<i32>} : memref<16x2x8x8xbf16, #tpu.memory_space<vmem>>, vector<1x1x8x8xbf16>,
    %83 = vector.extract_strided_slice %5 {offsets = [56, 0], sizes = [8, 16], strides = [1, 1]} : vector<128x16xf32> to vector<8x16xf32>
    %84 = vector.extract_strided_slice %83 {offsets = [0, 0], sizes = [8, 8], strides = [1, 1]} : vector<8x16xf32> to vector<8x8xf32>
    %85 = arith.truncf %84 : vector<8x8xf32> to vector<8x8xbf16>
    %c7 = arith.constant 7 : index
    %c0_55 = arith.constant 0 : index
    %c0_56 = arith.constant 0 : index
    %c0_57 = arith.constant 0 : index
    %86 = vector.load %arg4[%c7, %c0_55, %c0_56, %c0_57] : memref<16x2x8x8xbf16, #tpu.memory_space<vmem>>, vector<1x1x8x8xbf16>
    %87 = vector.shape_cast %86 : vector<1x1x8x8xbf16> to vector<8x8xbf16>
    %88 = vector.shape_cast %85 : vector<8x8xbf16> to vector<1x1x8x8xbf16>
    tpu.vector_store %arg4[%c7, %c0_55, %c0_56, %c0_57], %88 {strides = array<i32>} : memref<16x2x8x8xbf16, #tpu.memory_space<vmem>>, vector<1x1x8x8xbf16>,
    %89 = vector.extract_strided_slice %83 {offsets = [0, 8], sizes = [8, 8], strides = [1, 1]} : vector<8x16xf32> to vector<8x8xf32>
    %90 = arith.truncf %89 : vector<8x8xf32> to vector<8x8xbf16>
    %c7_58 = arith.constant 7 : index
    %c1_59 = arith.constant 1 : index
    %c0_60 = arith.constant 0 : index
    %c0_61 = arith.constant 0 : index
    %91 = vector.load %arg4[%c7_58, %c1_59, %c0_60, %c0_61] : memref<16x2x8x8xbf16, #tpu.memory_space<vmem>>, vector<1x1x8x8xbf16>
    %92 = vector.shape_cast %91 : vector<1x1x8x8xbf16> to vector<8x8xbf16>
    %93 = vector.shape_cast %90 : vector<8x8xbf16> to vector<1x1x8x8xbf16>
    tpu.vector_store %arg4[%c7_58, %c1_59, %c0_60, %c0_61], %93 {strides = array<i32>} : memref<16x2x8x8xbf16, #tpu.memory_space<vmem>>, vector<1x1x8x8xbf16>,
    %94 = vector.extract_strided_slice %5 {offsets = [64, 0], sizes = [8, 16], strides = [1, 1]} : vector<128x16xf32> to vector<8x16xf32>
    %95 = vector.extract_strided_slice %94 {offsets = [0, 0], sizes = [8, 8], strides = [1, 1]} : vector<8x16xf32> to vector<8x8xf32>
    %96 = arith.truncf %95 : vector<8x8xf32> to vector<8x8xbf16>
    %c8 = arith.constant 8 : index
    %c0_62 = arith.constant 0 : index
    %c0_63 = arith.constant 0 : index
    %c0_64 = arith.constant 0 : index
    %97 = vector.load %arg4[%c8, %c0_62, %c0_63, %c0_64] : memref<16x2x8x8xbf16, #tpu.memory_space<vmem>>, vector<1x1x8x8xbf16>
    %98 = vector.shape_cast %97 : vector<1x1x8x8xbf16> to vector<8x8xbf16>
    %99 = vector.shape_cast %96 : vector<8x8xbf16> to vector<1x1x8x8xbf16>
    tpu.vector_store %arg4[%c8, %c0_62, %c0_63, %c0_64], %99 {strides = array<i32>} : memref<16x2x8x8xbf16, #tpu.memory_space<vmem>>, vector<1x1x8x8xbf16>,
    %100 = vector.extract_strided_slice %94 {offsets = [0, 8], sizes = [8, 8], strides = [1, 1]} : vector<8x16xf32> to vector<8x8xf32>
    %101 = arith.truncf %100 : vector<8x8xf32> to vector<8x8xbf16>
    %c8_65 = arith.constant 8 : index
    %c1_66 = arith.constant 1 : index
    %c0_67 = arith.constant 0 : index
    %c0_68 = arith.constant 0 : index
    %102 = vector.load %arg4[%c8_65, %c1_66, %c0_67, %c0_68] : memref<16x2x8x8xbf16, #tpu.memory_space<vmem>>, vector<1x1x8x8xbf16>
    %103 = vector.shape_cast %102 : vector<1x1x8x8xbf16> to vector<8x8xbf16>
    %104 = vector.shape_cast %101 : vector<8x8xbf16> to vector<1x1x8x8xbf16>
    tpu.vector_store %arg4[%c8_65, %c1_66, %c0_67, %c0_68], %104 {strides = array<i32>} : memref<16x2x8x8xbf16, #tpu.memory_space<vmem>>, vector<1x1x8x8xbf16>,
    %105 = vector.extract_strided_slice %5 {offsets = [72, 0], sizes = [8, 16], strides = [1, 1]} : vector<128x16xf32> to vector<8x16xf32>
    %106 = vector.extract_strided_slice %105 {offsets = [0, 0], sizes = [8, 8], strides = [1, 1]} : vector<8x16xf32> to vector<8x8xf32>
    %107 = arith.truncf %106 : vector<8x8xf32> to vector<8x8xbf16>
    %c9 = arith.constant 9 : index
    %c0_69 = arith.constant 0 : index
    %c0_70 = arith.constant 0 : index
    %c0_71 = arith.constant 0 : index
    %108 = vector.load %arg4[%c9, %c0_69, %c0_70, %c0_71] : memref<16x2x8x8xbf16, #tpu.memory_space<vmem>>, vector<1x1x8x8xbf16>
    %109 = vector.shape_cast %108 : vector<1x1x8x8xbf16> to vector<8x8xbf16>
    %110 = vector.shape_cast %107 : vector<8x8xbf16> to vector<1x1x8x8xbf16>
    tpu.vector_store %arg4[%c9, %c0_69, %c0_70, %c0_71], %110 {strides = array<i32>} : memref<16x2x8x8xbf16, #tpu.memory_space<vmem>>, vector<1x1x8x8xbf16>,
    %111 = vector.extract_strided_slice %105 {offsets = [0, 8], sizes = [8, 8], strides = [1, 1]} : vector<8x16xf32> to vector<8x8xf32>
    %112 = arith.truncf %111 : vector<8x8xf32> to vector<8x8xbf16>
    %c9_72 = arith.constant 9 : index
    %c1_73 = arith.constant 1 : index
    %c0_74 = arith.constant 0 : index
    %c0_75 = arith.constant 0 : index
    %113 = vector.load %arg4[%c9_72, %c1_73, %c0_74, %c0_75] : memref<16x2x8x8xbf16, #tpu.memory_space<vmem>>, vector<1x1x8x8xbf16>
    %114 = vector.shape_cast %113 : vector<1x1x8x8xbf16> to vector<8x8xbf16>
    %115 = vector.shape_cast %112 : vector<8x8xbf16> to vector<1x1x8x8xbf16>
    tpu.vector_store %arg4[%c9_72, %c1_73, %c0_74, %c0_75], %115 {strides = array<i32>} : memref<16x2x8x8xbf16, #tpu.memory_space<vmem>>, vector<1x1x8x8xbf16>,
    %116 = vector.extract_strided_slice %5 {offsets = [80, 0], sizes = [8, 16], strides = [1, 1]} : vector<128x16xf32> to vector<8x16xf32>
    %117 = vector.extract_strided_slice %116 {offsets = [0, 0], sizes = [8, 8], strides = [1, 1]} : vector<8x16xf32> to vector<8x8xf32>
    %118 = arith.truncf %117 : vector<8x8xf32> to vector<8x8xbf16>
    %c10 = arith.constant 10 : index
    %c0_76 = arith.constant 0 : index
    %c0_77 = arith.constant 0 : index
    %c0_78 = arith.constant 0 : index
    %119 = vector.load %arg4[%c10, %c0_76, %c0_77, %c0_78] : memref<16x2x8x8xbf16, #tpu.memory_space<vmem>>, vector<1x1x8x8xbf16>
    %120 = vector.shape_cast %119 : vector<1x1x8x8xbf16> to vector<8x8xbf16>
    %121 = vector.shape_cast %118 : vector<8x8xbf16> to vector<1x1x8x8xbf16>
    tpu.vector_store %arg4[%c10, %c0_76, %c0_77, %c0_78], %121 {strides = array<i32>} : memref<16x2x8x8xbf16, #tpu.memory_space<vmem>>, vector<1x1x8x8xbf16>,
    %122 = vector.extract_strided_slice %116 {offsets = [0, 8], sizes = [8, 8], strides = [1, 1]} : vector<8x16xf32> to vector<8x8xf32>
    %123 = arith.truncf %122 : vector<8x8xf32> to vector<8x8xbf16>
    %c10_79 = arith.constant 10 : index
    %c1_80 = arith.constant 1 : index
    %c0_81 = arith.constant 0 : index
    %c0_82 = arith.constant 0 : index
    %124 = vector.load %arg4[%c10_79, %c1_80, %c0_81, %c0_82] : memref<16x2x8x8xbf16, #tpu.memory_space<vmem>>, vector<1x1x8x8xbf16>
    %125 = vector.shape_cast %124 : vector<1x1x8x8xbf16> to vector<8x8xbf16>
    %126 = vector.shape_cast %123 : vector<8x8xbf16> to vector<1x1x8x8xbf16>
    tpu.vector_store %arg4[%c10_79, %c1_80, %c0_81, %c0_82], %126 {strides = array<i32>} : memref<16x2x8x8xbf16, #tpu.memory_space<vmem>>, vector<1x1x8x8xbf16>,
    %127 = vector.extract_strided_slice %5 {offsets = [88, 0], sizes = [8, 16], strides = [1, 1]} : vector<128x16xf32> to vector<8x16xf32>
    %128 = vector.extract_strided_slice %127 {offsets = [0, 0], sizes = [8, 8], strides = [1, 1]} : vector<8x16xf32> to vector<8x8xf32>
    %129 = arith.truncf %128 : vector<8x8xf32> to vector<8x8xbf16>
    %c11 = arith.constant 11 : index
    %c0_83 = arith.constant 0 : index
    %c0_84 = arith.constant 0 : index
    %c0_85 = arith.constant 0 : index
    %130 = vector.load %arg4[%c11, %c0_83, %c0_84, %c0_85] : memref<16x2x8x8xbf16, #tpu.memory_space<vmem>>, vector<1x1x8x8xbf16>
    %131 = vector.shape_cast %130 : vector<1x1x8x8xbf16> to vector<8x8xbf16>
    %132 = vector.shape_cast %129 : vector<8x8xbf16> to vector<1x1x8x8xbf16>
    tpu.vector_store %arg4[%c11, %c0_83, %c0_84, %c0_85], %132 {strides = array<i32>} : memref<16x2x8x8xbf16, #tpu.memory_space<vmem>>, vector<1x1x8x8xbf16>,
    %133 = vector.extract_strided_slice %127 {offsets = [0, 8], sizes = [8, 8], strides = [1, 1]} : vector<8x16xf32> to vector<8x8xf32>
    %134 = arith.truncf %133 : vector<8x8xf32> to vector<8x8xbf16>
    %c11_86 = arith.constant 11 : index
    %c1_87 = arith.constant 1 : index
    %c0_88 = arith.constant 0 : index
    %c0_89 = arith.constant 0 : index
    %135 = vector.load %arg4[%c11_86, %c1_87, %c0_88, %c0_89] : memref<16x2x8x8xbf16, #tpu.memory_space<vmem>>, vector<1x1x8x8xbf16>
    %136 = vector.shape_cast %135 : vector<1x1x8x8xbf16> to vector<8x8xbf16>
    %137 = vector.shape_cast %134 : vector<8x8xbf16> to vector<1x1x8x8xbf16>
    tpu.vector_store %arg4[%c11_86, %c1_87, %c0_88, %c0_89], %137 {strides = array<i32>} : memref<16x2x8x8xbf16, #tpu.memory_space<vmem>>, vector<1x1x8x8xbf16>,
    %138 = vector.extract_strided_slice %5 {offsets = [96, 0], sizes = [8, 16], strides = [1, 1]} : vector<128x16xf32> to vector<8x16xf32>
    %139 = vector.extract_strided_slice %138 {offsets = [0, 0], sizes = [8, 8], strides = [1, 1]} : vector<8x16xf32> to vector<8x8xf32>
    %140 = arith.truncf %139 : vector<8x8xf32> to vector<8x8xbf16>
    %c12 = arith.constant 12 : index
    %c0_90 = arith.constant 0 : index
    %c0_91 = arith.constant 0 : index
    %c0_92 = arith.constant 0 : index
    %141 = vector.load %arg4[%c12, %c0_90, %c0_91, %c0_92] : memref<16x2x8x8xbf16, #tpu.memory_space<vmem>>, vector<1x1x8x8xbf16>
    %142 = vector.shape_cast %141 : vector<1x1x8x8xbf16> to vector<8x8xbf16>
    %143 = vector.shape_cast %140 : vector<8x8xbf16> to vector<1x1x8x8xbf16>
    tpu.vector_store %arg4[%c12, %c0_90, %c0_91, %c0_92], %143 {strides = array<i32>} : memref<16x2x8x8xbf16, #tpu.memory_space<vmem>>, vector<1x1x8x8xbf16>,
    %144 = vector.extract_strided_slice %138 {offsets = [0, 8], sizes = [8, 8], strides = [1, 1]} : vector<8x16xf32> to vector<8x8xf32>
    %145 = arith.truncf %144 : vector<8x8xf32> to vector<8x8xbf16>
    %c12_93 = arith.constant 12 : index
    %c1_94 = arith.constant 1 : index
    %c0_95 = arith.constant 0 : index
    %c0_96 = arith.constant 0 : index
    %146 = vector.load %arg4[%c12_93, %c1_94, %c0_95, %c0_96] : memref<16x2x8x8xbf16, #tpu.memory_space<vmem>>, vector<1x1x8x8xbf16>
    %147 = vector.shape_cast %146 : vector<1x1x8x8xbf16> to vector<8x8xbf16>
    %148 = vector.shape_cast %145 : vector<8x8xbf16> to vector<1x1x8x8xbf16>
    tpu.vector_store %arg4[%c12_93, %c1_94, %c0_95, %c0_96], %148 {strides = array<i32>} : memref<16x2x8x8xbf16, #tpu.memory_space<vmem>>, vector<1x1x8x8xbf16>,
    %149 = vector.extract_strided_slice %5 {offsets = [104, 0], sizes = [8, 16], strides = [1, 1]} : vector<128x16xf32> to vector<8x16xf32>
    %150 = vector.extract_strided_slice %149 {offsets = [0, 0], sizes = [8, 8], strides = [1, 1]} : vector<8x16xf32> to vector<8x8xf32>
    %151 = arith.truncf %150 : vector<8x8xf32> to vector<8x8xbf16>
    %c13 = arith.constant 13 : index
    %c0_97 = arith.constant 0 : index
    %c0_98 = arith.constant 0 : index
    %c0_99 = arith.constant 0 : index
    %152 = vector.load %arg4[%c13, %c0_97, %c0_98, %c0_99] : memref<16x2x8x8xbf16, #tpu.memory_space<vmem>>, vector<1x1x8x8xbf16>
    %153 = vector.shape_cast %152 : vector<1x1x8x8xbf16> to vector<8x8xbf16>
    %154 = vector.shape_cast %151 : vector<8x8xbf16> to vector<1x1x8x8xbf16>
    tpu.vector_store %arg4[%c13, %c0_97, %c0_98, %c0_99], %154 {strides = array<i32>} : memref<16x2x8x8xbf16, #tpu.memory_space<vmem>>, vector<1x1x8x8xbf16>,
    %155 = vector.extract_strided_slice %149 {offsets = [0, 8], sizes = [8, 8], strides = [1, 1]} : vector<8x16xf32> to vector<8x8xf32>
    %156 = arith.truncf %155 : vector<8x8xf32> to vector<8x8xbf16>
    %c13_100 = arith.constant 13 : index
    %c1_101 = arith.constant 1 : index
    %c0_102 = arith.constant 0 : index
    %c0_103 = arith.constant 0 : index
    %157 = vector.load %arg4[%c13_100, %c1_101, %c0_102, %c0_103] : memref<16x2x8x8xbf16, #tpu.memory_space<vmem>>, vector<1x1x8x8xbf16>
    %158 = vector.shape_cast %157 : vector<1x1x8x8xbf16> to vector<8x8xbf16>
    %159 = vector.shape_cast %156 : vector<8x8xbf16> to vector<1x1x8x8xbf16>
    tpu.vector_store %arg4[%c13_100, %c1_101, %c0_102, %c0_103], %159 {strides = array<i32>} : memref<16x2x8x8xbf16, #tpu.memory_space<vmem>>, vector<1x1x8x8xbf16>,
    %160 = vector.extract_strided_slice %5 {offsets = [112, 0], sizes = [8, 16], strides = [1, 1]} : vector<128x16xf32> to vector<8x16xf32>
    %161 = vector.extract_strided_slice %160 {offsets = [0, 0], sizes = [8, 8], strides = [1, 1]} : vector<8x16xf32> to vector<8x8xf32>
    %162 = arith.truncf %161 : vector<8x8xf32> to vector<8x8xbf16>
    %c14 = arith.constant 14 : index
    %c0_104 = arith.constant 0 : index
    %c0_105 = arith.constant 0 : index
    %c0_106 = arith.constant 0 : index
    %163 = vector.load %arg4[%c14, %c0_104, %c0_105, %c0_106] : memref<16x2x8x8xbf16, #tpu.memory_space<vmem>>, vector<1x1x8x8xbf16>
    %164 = vector.shape_cast %163 : vector<1x1x8x8xbf16> to vector<8x8xbf16>
    %165 = vector.shape_cast %162 : vector<8x8xbf16> to vector<1x1x8x8xbf16>
    tpu.vector_store %arg4[%c14, %c0_104, %c0_105, %c0_106], %165 {strides = array<i32>} : memref<16x2x8x8xbf16, #tpu.memory_space<vmem>>, vector<1x1x8x8xbf16>,
    %166 = vector.extract_strided_slice %160 {offsets = [0, 8], sizes = [8, 8], strides = [1, 1]} : vector<8x16xf32> to vector<8x8xf32>
    %167 = arith.truncf %166 : vector<8x8xf32> to vector<8x8xbf16>
    %c14_107 = arith.constant 14 : index
    %c1_108 = arith.constant 1 : index
    %c0_109 = arith.constant 0 : index
    %c0_110 = arith.constant 0 : index
    %168 = vector.load %arg4[%c14_107, %c1_108, %c0_109, %c0_110] : memref<16x2x8x8xbf16, #tpu.memory_space<vmem>>, vector<1x1x8x8xbf16>
    %169 = vector.shape_cast %168 : vector<1x1x8x8xbf16> to vector<8x8xbf16>
    %170 = vector.shape_cast %167 : vector<8x8xbf16> to vector<1x1x8x8xbf16>
    tpu.vector_store %arg4[%c14_107, %c1_108, %c0_109, %c0_110], %170 {strides = array<i32>} : memref<16x2x8x8xbf16, #tpu.memory_space<vmem>>, vector<1x1x8x8xbf16>,
    %171 = vector.extract_strided_slice %5 {offsets = [120, 0], sizes = [8, 16], strides = [1, 1]} : vector<128x16xf32> to vector<8x16xf32>
    %172 = vector.extract_strided_slice %171 {offsets = [0, 0], sizes = [8, 8], strides = [1, 1]} : vector<8x16xf32> to vector<8x8xf32>
    %173 = arith.truncf %172 : vector<8x8xf32> to vector<8x8xbf16>
    %c15 = arith.constant 15 : index
    %c0_111 = arith.constant 0 : index
    %c0_112 = arith.constant 0 : index
    %c0_113 = arith.constant 0 : index
    %174 = vector.load %arg4[%c15, %c0_111, %c0_112, %c0_113] : memref<16x2x8x8xbf16, #tpu.memory_space<vmem>>, vector<1x1x8x8xbf16>
    %175 = vector.shape_cast %174 : vector<1x1x8x8xbf16> to vector<8x8xbf16>
    %176 = vector.shape_cast %173 : vector<8x8xbf16> to vector<1x1x8x8xbf16>
    tpu.vector_store %arg4[%c15, %c0_111, %c0_112, %c0_113], %176 {strides = array<i32>} : memref<16x2x8x8xbf16, #tpu.memory_space<vmem>>, vector<1x1x8x8xbf16>,
    %177 = vector.extract_strided_slice %171 {offsets = [0, 8], sizes = [8, 8], strides = [1, 1]} : vector<8x16xf32> to vector<8x8xf32>
    %178 = arith.truncf %177 : vector<8x8xf32> to vector<8x8xbf16>
    %c15_114 = arith.constant 15 : index
    %c1_115 = arith.constant 1 : index
    %c0_116 = arith.constant 0 : index
    %c0_117 = arith.constant 0 : index
    %179 = vector.load %arg4[%c15_114, %c1_115, %c0_116, %c0_117] : memref<16x2x8x8xbf16, #tpu.memory_space<vmem>>, vector<1x1x8x8xbf16>
    %180 = vector.shape_cast %179 : vector<1x1x8x8xbf16> to vector<8x8xbf16>
    %181 = vector.shape_cast %178 : vector<8x8xbf16> to vector<1x1x8x8xbf16>
    tpu.vector_store %arg4[%c15_114, %c1_115, %c0_116, %c0_117], %181 {strides = array<i32>} : memref<16x2x8x8xbf16, #tpu.memory_space<vmem>>, vector<1x1x8x8xbf16>,
    return
  }
  func.func @transform_0(%arg0: i32) -> (i32, i32) {
    %c0_i32 = arith.constant 0 : i32
    %c0_i32_0 = arith.constant 0 : i32
    return %arg0, %c0_i32 : i32, i32
  }
  func.func @transform_1(%arg0: i32) -> (i32, i32) {
    %c0_i32 = arith.constant 0 : i32
    %c0_i32_0 = arith.constant 0 : i32
    %c0_i32_1 = arith.constant 0 : i32
    return %c0_i32, %c0_i32_0 : i32, i32
  }
  func.func @transform_2(%arg0: i32) -> (i32, i32) {
    %c0_i32 = arith.constant 0 : i32
    %c0_i32_0 = arith.constant 0 : i32
    %c0_i32_1 = arith.constant 0 : i32
    return %c0_i32, %c0_i32_0 : i32, i32
  }
  func.func @transform_3(%arg0: i32) -> (i32, i32, i32, i32) {
    %c0_i32 = arith.constant 0 : i32
    %c0_i32_0 = arith.constant 0 : i32
    %c0_i32_1 = arith.constant 0 : i32
    %c0_i32_2 = arith.constant 0 : i32
    return %arg0, %c0_i32, %c0_i32_0, %c0_i32_1 : i32, i32, i32, i32
  }
}

</mosaic_0001>

<llo_original>
// kernel: tpu_custom_call.1
$region0: #{tpu_custom_call.1}
  #allocation0 [shape = 'u32[]', space=smem, size = 0x4, offset = 0x4, fixed_abs, tag = 'smem constant byte address 0x4 - core index']
  #allocation1 [shape = 'u32[72,128]{1,0:T(1,128)}', space=vmem, size = 0x9000, scoped, tag = 'internal scratch']
  %s0 = inlined_call_operand.vmem [shape: f32[128,8], index: 0, kind: input, shape index: {}]
  %s1 = inlined_call_operand.vmem [shape: f32[8,16], index: 1, kind: input, shape index: {}]
  %s2 = inlined_call_operand.vmem [shape: f32[1,16], index: 2, kind: input, shape index: {}]
  %s3 = inlined_call_operand.vmem [shape: bf16[16,2,8,8], index: 3, kind: output, shape index: {}]
  %s4 = sld [smem:[#allocation0]]
  $region22: #{tpu_custom_call.1} parent=0
    _
  %s6 = ssub.s32 1, %s4
  %s7 = scalar_select 0, %s6, %s4
  // Predicated region
  $region2: #{tpu_custom_call.1} parent=0 // pred_check
    _
  $region3: #{tpu_custom_call.1} parent=0 // pred_check_branch
    %9 = sbr.rel (0) target = $region5
  $region4: #{tpu_custom_call.1} parent=0 // pred_region
    _
  $region5: #{tpu_custom_call.1} parent=0 // pred_fallthru
    _
  // Predicated region
  $region6: #{tpu_custom_call.1} parent=0 // pred_check
    _
  $region7: #{tpu_custom_call.1} parent=0 // pred_check_branch
    %11 = sbr.rel (0) target = $region9
  $region8: #{tpu_custom_call.1} parent=0 // pred_region
    _
  $region9: #{tpu_custom_call.1} parent=0 // pred_fallthru
    _
  // Predicated region
  $region10: #{tpu_custom_call.1} parent=0 // pred_check
    _
  $region11: #{tpu_custom_call.1} parent=0 // pred_check_branch
    %13 = sbr.rel (0) target = $region13
  $region12: #{tpu_custom_call.1} parent=0 // pred_region
    _
  $region13: #{tpu_custom_call.1} parent=0 // pred_fallthru
    _
  %v14 = vld [vmem:[%s0] sm:$0xff]
  %v15 = vld [vmem:[%s0 + $0x8] sm:$0xff]
  %v16 = vld [vmem:[%s0 + $0x10] sm:$0xff]
  %v17 = vld [vmem:[%s0 + $0x18] sm:$0xff]
  %v18 = vld [vmem:[%s0 + $0x20] sm:$0xff]
  %v19 = vld [vmem:[%s0 + $0x28] sm:$0xff]
  %v20 = vld [vmem:[%s0 + $0x30] sm:$0xff]
  %v21 = vld [vmem:[%s0 + $0x38] sm:$0xff]
  %v22 = vld [vmem:[%s0 + $0x40] sm:$0xff]
  %v23 = vld [vmem:[%s0 + $0x48] sm:$0xff]
  %v24 = vld [vmem:[%s0 + $0x50] sm:$0xff]
  %v25 = vld [vmem:[%s0 + $0x58] sm:$0xff]
  %v26 = vld [vmem:[%s0 + $0x60] sm:$0xff]
  %v27 = vld [vmem:[%s0 + $0x68] sm:$0xff]
  %v28 = vld [vmem:[%s0 + $0x70] sm:$0xff]
  %v29 = vld [vmem:[%s0 + $0x78] sm:$0xff]
  %v30 = vld [vmem:[%s1] sm:$0xff]
  %v31 = vld [vmem:[%s2] sm:$0x1]
  %v33 = vperm.slane %v31, 0
  %vm35 = vcmask 64512
  %v37 = vsel %vm35, %v14, 0
  %v40 = vsel %vm35, %v15, 0
  %v43 = vsel %vm35, %v16, 0
  %v46 = vsel %vm35, %v17, 0
  %v49 = vsel %vm35, %v18, 0
  %v52 = vsel %vm35, %v19, 0
  %v55 = vsel %vm35, %v20, 0
  %v58 = vsel %vm35, %v21, 0
  %v61 = vsel %vm35, %v22, 0
  %v64 = vsel %vm35, %v23, 0
  %v67 = vsel %vm35, %v24, 0
  %v70 = vsel %vm35, %v25, 0
  %v73 = vsel %vm35, %v26, 0
  %v76 = vsel %vm35, %v27, 0
  %v79 = vsel %vm35, %v28, 0
  %v82 = vsel %vm35, %v29, 0
  %84 = vmatpush.msra.mxu0 0.0
  %85 = vmatpush.msra.mxu0 0.0
  %86 = vmatpush.msra.mxu0 0.0
  %87 = vmatpush.msra.mxu0 0.0
  %88 = vmatpush.msra.mxu0 0.0
  %89 = vmatpush.msra.mxu0 0.0
  %90 = vmatpush.msra.mxu0 0.0
  %91 = vmatpush.msra.mxu0 0.0
  %92 = vmatpush.msra.mxu0 0.0
  %93 = vmatpush.msra.mxu0 0.0
  %94 = vmatpush.msra.mxu0 0.0
  %95 = vmatpush.msra.mxu0 0.0
  %96 = vmatpush.msra.mxu0 0.0
  %97 = vmatpush.msra.mxu0 0.0
  %98 = vmatpush.msra.mxu0 0.0
  %99 = vmatpush.msra.mxu0 %v30
  %100 = vmatmul.f32.gmra.mxu0 %v37
  %v101 = vpop.f32.mrf.mxu0
  %v102 = vadd.f32 %v33, %v101
  %103 = vmatmul.f32.gmra.mxu0 %v40
  %v104 = vpop.f32.mrf.mxu0
  %v105 = vadd.f32 %v33, %v104
  %106 = vmatmul.f32.gmra.mxu0 %v43
  %v107 = vpop.f32.mrf.mxu0
  %v108 = vadd.f32 %v33, %v107
  %109 = vmatmul.f32.gmra.mxu0 %v46
  %v110 = vpop.f32.mrf.mxu0
  %v111 = vadd.f32 %v33, %v110
  %112 = vmatmul.f32.gmra.mxu0 %v49
  %v113 = vpop.f32.mrf.mxu0
  %v114 = vadd.f32 %v33, %v113
  %115 = vmatmul.f32.gmra.mxu0 %v52
  %v116 = vpop.f32.mrf.mxu0
  %v117 = vadd.f32 %v33, %v116
  %118 = vmatmul.f32.gmra.mxu0 %v55
  %v119 = vpop.f32.mrf.mxu0
  %v120 = vadd.f32 %v33, %v119
  %121 = vmatmul.f32.gmra.mxu0 %v58
  %v122 = vpop.f32.mrf.mxu0
  %v123 = vadd.f32 %v33, %v122
  %124 = vmatmul.f32.gmra.mxu0 %v61
  %v125 = vpop.f32.mrf.mxu0
  %v126 = vadd.f32 %v33, %v125
  %127 = vmatmul.f32.gmra.mxu0 %v64
  %v128 = vpop.f32.mrf.mxu0
  %v129 = vadd.f32 %v33, %v128
  %130 = vmatmul.f32.gmra.mxu0 %v67
  %v131 = vpop.f32.mrf.mxu0
  %v132 = vadd.f32 %v33, %v131
  %133 = vmatmul.f32.gmra.mxu0 %v70
  %v134 = vpop.f32.mrf.mxu0
  %v135 = vadd.f32 %v33, %v134
  %136 = vmatmul.f32.gmra.mxu0 %v73
  %v137 = vpop.f32.mrf.mxu0
  %v138 = vadd.f32 %v33, %v137
  %139 = vmatmul.f32.gmra.mxu0 %v76
  %v140 = vpop.f32.mrf.mxu0
  %v141 = vadd.f32 %v33, %v140
  %142 = vmatmul.f32.gmra.mxu0 %v79
  %v143 = vpop.f32.mrf.mxu0
  %v144 = vadd.f32 %v33, %v143
  %145 = vmatmul.f32.gmra.mxu0 %v82
  %v146 = vpop.f32.mrf.mxu0
  %v147 = vadd.f32 %v33, %v146
  %148 = vdwg.mxu0
  %v149 = vpack.c.bf16 %v102, %v102
  %vm150 = vcmask 60416
  %151 = vst.msk [vmem:[%s3] sm:$0xf] %vm150, %v149
  %153 = vrot.lane.b32.xlu0 %v149, 120
  %v154 = vpop.permute.xlu0 %153
  %s156 = scalar_lea.vmem %s3, 4
  %157 = vst.msk [vmem:[%s156] sm:$0xf] %vm150, %v154
  %v158 = vpack.c.bf16 %v105, %v105
  %s159 = scalar_lea.vmem %s3, 8
  %160 = vst.msk [vmem:[%s159] sm:$0xf] %vm150, %v158
  %162 = vrot.lane.b32.xlu0 %v158, 120
  %v163 = vpop.permute.xlu0 %162
  %s165 = scalar_lea.vmem %s3, 12
  %166 = vst.msk [vmem:[%s165] sm:$0xf] %vm150, %v163
  %v167 = vpack.c.bf16 %v108, %v108
  %s168 = scalar_lea.vmem %s3, 16
  %169 = vst.msk [vmem:[%s168] sm:$0xf] %vm150, %v167
  %171 = vrot.lane.b32.xlu0 %v167, 120
  %v172 = vpop.permute.xlu0 %171
  %s174 = scalar_lea.vmem %s3, 20
  %175 = vst.msk [vmem:[%s174] sm:$0xf] %vm150, %v172
  %v176 = vpack.c.bf16 %v111, %v111
  %s177 = scalar_lea.vmem %s3, 24
  %178 = vst.msk [vmem:[%s177] sm:$0xf] %vm150, %v176
  %180 = vrot.lane.b32.xlu0 %v176, 120
  %v181 = vpop.permute.xlu0 %180
  %s183 = scalar_lea.vmem %s3, 28
  %184 = vst.msk [vmem:[%s183] sm:$0xf] %vm150, %v181
  %v185 = vpack.c.bf16 %v114, %v114
  %s186 = scalar_lea.vmem %s3, 32
  %187 = vst.msk [vmem:[%s186] sm:$0xf] %vm150, %v185
  %189 = vrot.lane.b32.xlu0 %v185, 120
  %v190 = vpop.permute.xlu0 %189
  %s192 = scalar_lea.vmem %s3, 36
  %193 = vst.msk [vmem:[%s192] sm:$0xf] %vm150, %v190
  %v194 = vpack.c.bf16 %v117, %v117
  %s195 = scalar_lea.vmem %s3, 40
  %196 = vst.msk [vmem:[%s195] sm:$0xf] %vm150, %v194
  %198 = vrot.lane.b32.xlu0 %v194, 120
  %v199 = vpop.permute.xlu0 %198
  %s201 = scalar_lea.vmem %s3, 44
  %202 = vst.msk [vmem:[%s201] sm:$0xf] %vm150, %v199
  %v203 = vpack.c.bf16 %v120, %v120
  %s204 = scalar_lea.vmem %s3, 48
  %205 = vst.msk [vmem:[%s204] sm:$0xf] %vm150, %v203
  %207 = vrot.lane.b32.xlu0 %v203, 120
  %v208 = vpop.permute.xlu0 %207
  %s210 = scalar_lea.vmem %s3, 52
  %211 = vst.msk [vmem:[%s210] sm:$0xf] %vm150, %v208
  %v212 = vpack.c.bf16 %v123, %v123
  %s213 = scalar_lea.vmem %s3, 56
  %214 = vst.msk [vmem:[%s213] sm:$0xf] %vm150, %v212
  %216 = vrot.lane.b32.xlu0 %v212, 120
  %v217 = vpop.permute.xlu0 %216
  %s219 = scalar_lea.vmem %s3, 60
  %220 = vst.msk [vmem:[%s219] sm:$0xf] %vm150, %v217
  %v221 = vpack.c.bf16 %v126, %v126
  %s222 = scalar_lea.vmem %s3, 64
  %223 = vst.msk [vmem:[%s222] sm:$0xf] %vm150, %v221
  %225 = vrot.lane.b32.xlu0 %v221, 120
  %v226 = vpop.permute.xlu0 %225
  %s228 = scalar_lea.vmem %s3, 68
  %229 = vst.msk [vmem:[%s228] sm:$0xf] %vm150, %v226
  %v230 = vpack.c.bf16 %v129, %v129
  %s231 = scalar_lea.vmem %s3, 72
  %232 = vst.msk [vmem:[%s231] sm:$0xf] %vm150, %v230
  %234 = vrot.lane.b32.xlu0 %v230, 120
  %v235 = vpop.permute.xlu0 %234
  %s237 = scalar_lea.vmem %s3, 76
  %238 = vst.msk [vmem:[%s237] sm:$0xf] %vm150, %v235
  %v239 = vpack.c.bf16 %v132, %v132
  %s240 = scalar_lea.vmem %s3, 80
  %241 = vst.msk [vmem:[%s240] sm:$0xf] %vm150, %v239
  %243 = vrot.lane.b32.xlu0 %v239, 120
  %v244 = vpop.permute.xlu0 %243
  %s246 = scalar_lea.vmem %s3, 84
  %247 = vst.msk [vmem:[%s246] sm:$0xf] %vm150, %v244
  %v248 = vpack.c.bf16 %v135, %v135
  %s249 = scalar_lea.vmem %s3, 88
  %250 = vst.msk [vmem:[%s249] sm:$0xf] %vm150, %v248
  %252 = vrot.lane.b32.xlu0 %v248, 120
  %v253 = vpop.permute.xlu0 %252
  %s255 = scalar_lea.vmem %s3, 92
  %256 = vst.msk [vmem:[%s255] sm:$0xf] %vm150, %v253
  %v257 = vpack.c.bf16 %v138, %v138
  %s258 = scalar_lea.vmem %s3, 96
  %259 = vst.msk [vmem:[%s258] sm:$0xf] %vm150, %v257
  %261 = vrot.lane.b32.xlu0 %v257, 120
  %v262 = vpop.permute.xlu0 %261
  %s264 = scalar_lea.vmem %s3, 100
  %265 = vst.msk [vmem:[%s264] sm:$0xf] %vm150, %v262
  %v266 = vpack.c.bf16 %v141, %v141
  %s267 = scalar_lea.vmem %s3, 104
  %268 = vst.msk [vmem:[%s267] sm:$0xf] %vm150, %v266
  %270 = vrot.lane.b32.xlu0 %v266, 120
  %v271 = vpop.permute.xlu0 %270
  %s273 = scalar_lea.vmem %s3, 108
  %274 = vst.msk [vmem:[%s273] sm:$0xf] %vm150, %v271
  %v275 = vpack.c.bf16 %v144, %v144
  %s276 = scalar_lea.vmem %s3, 112
  %277 = vst.msk [vmem:[%s276] sm:$0xf] %vm150, %v275
  %279 = vrot.lane.b32.xlu0 %v275, 120
  %v280 = vpop.permute.xlu0 %279
  %s282 = scalar_lea.vmem %s3, 116
  %283 = vst.msk [vmem:[%s282] sm:$0xf] %vm150, %v280
  %v284 = vpack.c.bf16 %v147, %v147
  %s285 = scalar_lea.vmem %s3, 120
  %286 = vst.msk [vmem:[%s285] sm:$0xf] %vm150, %v284
  %288 = vrot.lane.b32.xlu0 %v284, 120
  %v289 = vpop.permute.xlu0 %288
  %s291 = scalar_lea.vmem %s3, 124
  %292 = vst.msk [vmem:[%s291] sm:$0xf] %vm150, %v289
  // Predicated region
  $region14: #{tpu_custom_call.1} parent=0 // pred_check
    _
  $region15: #{tpu_custom_call.1} parent=0 // pred_check_branch
    %294 = sbr.rel (0) target = $region17
  $region16: #{tpu_custom_call.1} parent=0 // pred_region
    _
  $region17: #{tpu_custom_call.1} parent=0 // pred_fallthru
    _
  // Predicated region
  $region18: #{tpu_custom_call.1} parent=0 // pred_check
    _
  $region19: #{tpu_custom_call.1} parent=0 // pred_check_branch
    %296 = sbr.rel (0) target = $region21
  $region20: #{tpu_custom_call.1} parent=0 // pred_region
    _
  $region21: #{tpu_custom_call.1} parent=0 // pred_fallthru
    _

</llo_original>
